<compile_context>
chip_gen: v7x
topology: tpu7x:2x2x1
jax: 0.10.0
libtpu: 0.0.40
codegen_flags: <defaults>
</compile_context>

<pallas_src>
import jax
import jax.numpy as jnp
from jax.experimental import pallas as pl
from jax.experimental.pallas import tpu as pltpu

_MIN_LANES = 128                 # minimum unmasked lane width
_TARGET_BLOCK_BYTES = 4 << 20    # ~4 MiB per buffer per pipeline slot
_TARGET_GRID_STEPS = 4           # keep a multi-step grid for pipelining/megacore
_VMEM_LIMIT_BYTES = 40 << 20     # 4 MiB x 2 arrays x 2 buffers = 16 MiB (+headroom)


def _hswish_math(x):
    """HSigmoid: ReLU6(x+3)/6 ; HSwish: x * HSigmoid(x), in x's dtype."""
    dt = x.dtype
    three = jnp.asarray(3.0, dt)
    zero = jnp.asarray(0.0, dt)
    six = jnp.asarray(6.0, dt)
    inv6 = jnp.asarray(1.0 / 6.0, dt)
    return x * (jnp.clip(x + three, zero, six) * inv6)


def _hswish_kernel(x_ref, o_ref):
    o_ref[...] = _hswish_math(x_ref[...]).astype(o_ref.dtype)


def _round_up(n, m):
    return ((n + m - 1) // m) * m


def _pick_lanes(total):
    """Widest lane-dense width that still leaves enough rows for >=4 steps."""
    for lanes in (1024, 512, 256, _MIN_LANES):
        if total % lanes == 0 and total // lanes >= 32:
            return lanes
    return _MIN_LANES


def _pick_tile_rows(rows, itemsize, lanes):
    """Dtype-aware block rows: ~4 MiB blocks, but keep >= ~4 grid steps."""
    # Sublane packing multiple: 8 for f32, 16 for bf16, 32 for int8/fp8.
    sub = 8 * max(1, 4 // itemsize)
    if rows <= sub:
        return rows  # full-extent block (satisfies (8,128) via full-dim clause)
    max_rows = max(sub, (_TARGET_BLOCK_BYTES // (lanes * itemsize)) // sub * sub)
    tile = _round_up(pl.cdiv(rows, _TARGET_GRID_STEPS), sub)
    return max(sub, min(tile, max_rows))


def _hswish_2d(x2d):
    rows, lanes = x2d.shape
    tile_rows = _pick_tile_rows(rows, x2d.dtype.itemsize, lanes)
    grid = (pl.cdiv(rows, tile_rows),)  # last block may be partial (masked)
    return pl.pallas_call(
        _hswish_kernel,
        out_shape=jax.ShapeDtypeStruct((rows, lanes), x2d.dtype),
        grid_spec=pltpu.PrefetchScalarGridSpec(
            num_scalar_prefetch=0,
            grid=grid,
            in_specs=[pl.BlockSpec((tile_rows, lanes), lambda i: (i, 0))],
            out_specs=pl.BlockSpec((tile_rows, lanes), lambda i: (i, 0)),
        ),
        compiler_params=pltpu.CompilerParams(
            # "parallel" -> v7x megacore shards the grid steps across its 2 TCs.
            dimension_semantics=("parallel",),
            vmem_limit_bytes=_VMEM_LIMIT_BYTES,
        ),
    )(x2d)


@jax.jit
def hswish(x: jax.Array) -> jax.Array:
    """Elementwise HSwish on an NCHW (or any-shape) tensor via Pallas TPU."""
    orig_shape = x.shape
    total = x.size
    if total == 0:
        return x

    x_flat = jnp.reshape(x, (-1,))
    rem = total % _MIN_LANES

    if rem == 0:
        # Common path: fully lane-aligned, zero extra HBM passes.
        lanes = _pick_lanes(total)
        out2d = _hswish_2d(jnp.reshape(x_flat, (total // lanes, lanes)))
        return jnp.reshape(out2d, orig_shape)

    # Ragged (rare) path: run the kernel on the 128-aligned prefix and compute
    # the <128-element tail with plain jnp (no full-array pad / slice copies).
    aligned = total - rem
    if aligned == 0:
        # Fewer than 128 elements total: not worth a kernel launch.
        return jnp.reshape(_hswish_math(x_flat), orig_shape)
    prefix2d = jnp.reshape(x_flat[:aligned], (aligned // _MIN_LANES, _MIN_LANES))
    out_prefix = jnp.reshape(_hswish_2d(prefix2d), (-1,))
    out_tail = _hswish_math(x_flat[aligned:])
    return jnp.reshape(jnp.concatenate([out_prefix, out_tail]), orig_shape)


def _hswish_ref_f32(x):
    xf = x.astype(jnp.float32)
    return xf * (jnp.clip(xf + 3.0, 0.0, 6.0) / 6.0)


if __name__ == "__main__":
    key = jax.random.PRNGKey(0)
    k1, k2, k3, k4 = jax.random.split(key, 4)

    # Small NCHW input (PyTorch conv convention): multi-step grid via min-step logic.
    x_small = jax.random.normal(k1, (2, 4, 16, 16), dtype=jnp.float32) * 4.0
    out_small = jax.block_until_ready(hswish(x_small))
    assert out_small.shape == x_small.shape and out_small.dtype == x_small.dtype
    assert jnp.allclose(out_small, _hswish_ref_f32(x_small), atol=1e-6, rtol=1e-6), \
        "mismatch vs reference (small)"

    # Larger input: wide-lane slab (1024), multi-step grid, partial last block.
    x_big = jax.random.normal(k2, (2, 8, 200, 200), dtype=jnp.float32) * 4.0
    out_big = jax.block_until_ready(hswish(x_big))
    assert out_big.shape == x_big.shape and out_big.dtype == x_big.dtype
    assert jnp.allclose(out_big, _hswish_ref_f32(x_big), atol=1e-6, rtol=1e-6), \
        "mismatch vs reference (big / partial block)"

    # Odd element count: 128-aligned prefix through the kernel + jnp tail.
    x_odd = jax.random.normal(k3, (2, 3, 33, 37), dtype=jnp.float32) * 4.0
    out_odd = jax.block_until_ready(hswish(x_odd))
    assert out_odd.shape == x_odd.shape and out_odd.dtype == x_odd.dtype
    assert jnp.allclose(out_odd, _hswish_ref_f32(x_odd), atol=1e-6, rtol=1e-6), \
        "mismatch vs reference (odd / ragged path)"

    # bf16 path: dtype-aware sublane multiple + block bytes; looser tolerance.
    x_bf16 = (jax.random.normal(k4, (2, 4, 16, 16), dtype=jnp.float32) * 4.0
              ).astype(jnp.bfloat16)
    out_bf16 = jax.block_until_ready(hswish(x_bf16))
    assert out_bf16.shape == x_bf16.shape and out_bf16.dtype == jnp.bfloat16
    assert jnp.allclose(out_bf16.astype(jnp.float32), _hswish_ref_f32(x_bf16),
                        atol=0.1, rtol=0.05), "mismatch vs reference (bf16)"

    print("KERNEL_OK")
</pallas_src>

<mosaic_0001>
module attributes {stable_mosaic.version = 11 : i64} {
  func.func @_hswish_kernel(%arg0: i32, %arg1: memref<8x128xf32, #tpu.memory_space<vmem>>, %arg2: memref<8x128xf32, #tpu.memory_space<vmem>>) attributes {dimension_semantics = [#tpu.dimension_semantics<parallel>], iteration_bounds = array<i64: 2>, scalar_prefetch = 0 : i64, scratch_operands = 0 : i64, tpu.core_type = #tpu.core_type<tc>, window_params = [{transform_indices = @transform_0, window_bounds = array<i64: 8, 128>}, {transform_indices = @transform_1, window_bounds = array<i64: 8, 128>}]} {
    %c0 = arith.constant 0 : index
    %c0_0 = arith.constant 0 : index
    %0 = vector.load %arg1[%c0, %c0_0] : memref<8x128xf32, #tpu.memory_space<vmem>>, vector<8x128xf32>
    %cst = arith.constant 3.000000e+00 : f32
    %1 = vector.broadcast %cst : f32 to vector<8x128xf32>
    %2 = arith.addf %0, %1 : vector<8x128xf32>
    %cst_1 = arith.constant 0.000000e+00 : f32
    %cst_2 = arith.constant 6.000000e+00 : f32
    %3 = vector.broadcast %cst_1 : f32 to vector<8x128xf32>
    %4 = arith.maximumf %3, %2 : vector<8x128xf32>
    %5 = vector.broadcast %cst_2 : f32 to vector<8x128xf32>
    %6 = arith.minimumf %5, %4 : vector<8x128xf32>
    %cst_3 = arith.constant 0.166666672 : f32
    %7 = vector.broadcast %cst_3 : f32 to vector<8x128xf32>
    %8 = arith.mulf %6, %7 : vector<8x128xf32>
    %9 = arith.mulf %0, %8 : vector<8x128xf32>
    %c0_4 = arith.constant 0 : index
    %c0_5 = arith.constant 0 : index
    %10 = vector.load %arg2[%c0_4, %c0_5] : memref<8x128xf32, #tpu.memory_space<vmem>>, vector<8x128xf32>
    tpu.vector_store %arg2[%c0_4, %c0_5], %9 {strides = array<i32>} : memref<8x128xf32, #tpu.memory_space<vmem>>, vector<8x128xf32>,
    return
  }
  func.func @transform_0(%arg0: i32) -> (i32, i32) {
    %c0_i32 = arith.constant 0 : i32
    %c0_i32_0 = arith.constant 0 : i32
    return %arg0, %c0_i32 : i32, i32
  }
  func.func @transform_1(%arg0: i32) -> (i32, i32) {
    %c0_i32 = arith.constant 0 : i32
    %c0_i32_0 = arith.constant 0 : i32
    return %arg0, %c0_i32 : i32, i32
  }
}

</mosaic_0001>

<llo_original>
// kernel: hswish.1
$region0: #{hswish.1}
  #allocation0 [shape = 'u32[]', space=smem, size = 0x4, offset = 0x4, fixed_abs, tag = 'smem constant byte address 0x4 - core index']
  #allocation1 [shape = 'u32[144,128]{1,0:T(1,128)}', space=vmem, size = 0x12000, scoped, tag = 'internal scratch']
  %s0 = inlined_call_operand.vmem [shape: f32[16,128], index: 0, kind: input, shape index: {}]
  %s1 = inlined_call_operand.vmem [shape: f32[16,128], index: 1, kind: output, shape index: {}]
  %s2 = sld [smem:[#allocation0]]
  $region37: #{hswish.1} parent=0
    _
  %s4 = ssub.s32 1, %s2
  %s5 = scalar_select 0, %s4, %s2
  loop: start=0, step=1, limit=4
  $region2: #{hswish.1} parent=0 // loop_pre_header
    _
  $region3: #{hswish.1} parent=0 // loop_header
    %s7 = sphi 0, %s11
    %p8 = scmp.ge.s32.totalorder %s7, 4
    %s17 = sphi 0, %s19
    %s20 = sphi 0, %s17
    %s21 = sphi 0, %s20
    %s37 = sphi 0, %s21
    %s43 = sphi 0, %s45
    %s46 = sphi 0, %s43
    %s47 = sphi 0, %s46
    %s63 = sphi 0, %s47
  $region4: #{hswish.1} parent=0 // loop_header_branch
    %10 = sbr.rel (%p8) target = $region8
  $region5: #{hswish.1} parent=0 // loop_body
    %s12 = ssub.s32 %s7, 1
    %s13 = ssub.s32 %s7, 2
    %s14 = sadd.s32 %s7, 1
    %s15 = ssub.s32 %s7, %s14
    %p16 = scmp.eq.s32.totalorder %s15, 0
    %s18 = sadd.s32 %s17, 1
    %s19 = scalar_select %p16, %s17, %s18
    %p22 = pneg %p16
    %p23 = scmp.eq.s32.totalorder %s7, 1
    %p24 = por %p22, %p23
    %p25 = scmp.ne.s32.totalorder %s17, %s20
    %p26 = scmp.eq.s32.totalorder %s7, 0
    %p27 = por %p25, %p26
    %p28 = scmp.ne.s32.totalorder %s17, %s20
    %p29 = scmp.eq.s32.totalorder %s12, 1
    %p30 = por %p28, %p29
    %p31 = scmp.ne.s32.totalorder %s20, %s21
    %p32 = scmp.eq.s32.totalorder %s12, 0
    %p33 = por %p31, %p32
    %p34 = scmp.ne.s32.totalorder %s20, %s21
    %p35 = scmp.eq.s32.totalorder %s13, 1
    %p36 = por %p34, %p35
    %p38 = scmp.ne.s32.totalorder %s21, %s37
    %p39 = scmp.eq.s32.totalorder %s13, 0
    %p40 = por %p38, %p39
    %s41 = ssub.s32 %s7, %s14
    %p42 = scmp.eq.s32.totalorder %s41, 0
    %s44 = sadd.s32 %s43, 1
    %s45 = scalar_select %p42, %s43, %s44
    %p48 = pneg %p42
    %p49 = scmp.eq.s32.totalorder %s7, 1
    %p50 = por %p48, %p49
    %p51 = scmp.ne.s32.totalorder %s43, %s46
    %p52 = scmp.eq.s32.totalorder %s7, 0
    %p53 = por %p51, %p52
    %p54 = scmp.ne.s32.totalorder %s43, %s46
    %p55 = scmp.eq.s32.totalorder %s12, 1
    %p56 = por %p54, %p55
    %p57 = scmp.ne.s32.totalorder %s46, %s47
    %p58 = scmp.eq.s32.totalorder %s12, 0
    %p59 = por %p57, %p58
    %p60 = scmp.ne.s32.totalorder %s46, %s47
    %p61 = scmp.eq.s32.totalorder %s13, 1
    %p62 = por %p60, %p61
    %p64 = scmp.ne.s32.totalorder %s47, %s63
    %p65 = scmp.eq.s32.totalorder %s13, 0
    %p66 = por %p64, %p65
    %p67 = scmp.le.s32.totalorder 1, %s7
    %p68 = scmp.lt.s32.totalorder %s7, 3
    %p69 = pnand %p67, %p68
    %p70 = pneg %p69
    // Predicated region
    $region9: #{hswish.1} parent=5 // pred_check
      _
    $region10: #{hswish.1} parent=5 // pred_check_branch
      %72 = sbr.rel (%p69) target = $region12
    $region11: #{hswish.1} parent=5 // pred_region
      %s73 = ssub.s32 %s7, 1
    $region12: #{hswish.1} parent=5 // pred_fallthru
      _
    %p74 = scmp.lt.s32.totalorder %s7, 2
    // Predicated region
    $region13: #{hswish.1} parent=5 // pred_check
      %p75 = pneg %p74
    $region14: #{hswish.1} parent=5 // pred_check_branch
      %77 = sbr.rel (%p75) target = $region16
    $region15: #{hswish.1} parent=5 // pred_region
      // Predicated region
      $region17: #{hswish.1} parent=15 // pred_check
        %p78 = pneg %p27
      $region18: #{hswish.1} parent=15 // pred_check_branch
        %80 = sbr.rel (%p78) target = $region20
      $region19: #{hswish.1} parent=15 // pred_region
        %p81 = scmp.lt.s32.totalorder %s7, 1
        %s82 = scalar_select %p81, %s7, 1
        %s83 = smul.addr %s82, 8
        %s84 = scalar_lea.vmem %s0, %s83
      $region20: #{hswish.1} parent=15 // pred_fallthru
        _
    $region16: #{hswish.1} parent=5 // pred_fallthru
      _
    %p85 = scmp.le.s32.totalorder 1, %s7
    %p86 = scmp.lt.s32.totalorder %s7, 3
    %p87 = pnand %p85, %p86
    %p88 = pneg %p87
    // Predicated region
    $region21: #{hswish.1} parent=5 // pred_check
      _
    $region22: #{hswish.1} parent=5 // pred_check_branch
      %90 = sbr.rel (%p87) target = $region24
    $region23: #{hswish.1} parent=5 // pred_region
      %s91 = ssub.s32 %s7, 1
      %p92 = scmp.lt.s32.totalorder %s12, 1
      %s93 = scalar_select %p92, %s12, 1
      %s94 = smul.addr %s93, 8
      %s95 = scalar_lea.vmem %s0, %s94
      %p96 = pneg %p33
      %p97 = pneg %p30
      %p98 = pneg %p59
      %p99 = pneg %p56
      %p100 = scmp.lt.s32.totalorder %s12, 1
      %s101 = scalar_select %p100, %s12, 1
      %s102 = smul.addr %s101, 8
      %s103 = scalar_lea.vmem %s1, %s102
      %p104 = scmp.lt.s32.totalorder %s12, 1
      %s105 = scalar_select %p104, %s12, 1
      %s106 = smul.addr %s105, 8
      %s107 = scalar_lea.vmem %s0, %s106
      %p108 = scmp.lt.s32.totalorder %s12, 1
      %s109 = scalar_select %p108, %s12, 1
      %s110 = smul.addr %s109, 8
      %s111 = scalar_lea.vmem %s1, %s110
      %v112 = vld [vmem:[%s107] sm:$0xff]
      %v113 = vadd.f32 %v112, 3.0
      %v114 = vmax.f32 %v113, 0.0
      %v115 = vmin.f32 %v114, 6.0
      %v116 = vmul.f32 %v115, 0.16666667
      %v117 = vmul.f32 %v112, %v116
      %118 = vst [vmem:[%s111] sm:$0xff] %v117
      %p119 = scmp.lt.s32.totalorder %s12, 1
      %s120 = scalar_select %p119, %s12, 1
      %s121 = smul.addr %s120, 8
      %s122 = scalar_lea.vmem %s1, %s121
      // Predicated region
      $region25: #{hswish.1} parent=23 // pred_check
        %p123 = pneg %p56
      $region26: #{hswish.1} parent=23 // pred_check_branch
        %125 = sbr.rel (%p123) target = $region28
      $region27: #{hswish.1} parent=23 // pred_region
        _
      $region28: #{hswish.1} parent=23 // pred_fallthru
        _
    $region24: #{hswish.1} parent=5 // pred_fallthru
      _
    %p126 = scmp.le.s32.totalorder 2, %s7
    // Predicated region
    $region29: #{hswish.1} parent=5 // pred_check
      %p127 = pneg %p126
    $region30: #{hswish.1} parent=5 // pred_check_branch
      %129 = sbr.rel (%p127) target = $region32
    $region31: #{hswish.1} parent=5 // pred_region
      %s130 = ssub.s32 %s7, 2
      // Predicated region
      $region33: #{hswish.1} parent=31 // pred_check
        %p131 = pneg %p62
      $region34: #{hswish.1} parent=31 // pred_check_branch
        %133 = sbr.rel (%p131) target = $region36
      $region35: #{hswish.1} parent=31 // pred_region
        %p134 = scmp.lt.s32.totalorder %s13, 1
        %s135 = scalar_select %p134, %s13, 1
        %s136 = smul.addr %s135, 8
        %s137 = scalar_lea.vmem %s1, %s136
      $region36: #{hswish.1} parent=31 // pred_fallthru
        _
    $region32: #{hswish.1} parent=5 // pred_fallthru
      _
  $region6: #{hswish.1} parent=0 // loop_footer
    %s11 = sadd.s32 1, %s7
  $region7: #{hswish.1} parent=0 // loop_footer_branch
    %6 = sbr.rel target = $region3
  $region8: #{hswish.1} parent=0 // loop_exit
    _

</llo_original>
